<compile_context>
chip_gen: v7x
topology: tpu7x:2x2x1
jax: 0.10.0
libtpu: 0.0.40
codegen_flags: <defaults>
</compile_context>

<pallas_src>
import jax
import jax.numpy as jnp
from jax.experimental import pallas as pl
from jax.experimental.pallas import tpu as pltpu


def _round_up(x: int, m: int) -> int:
    return (x + m - 1) // m * m


def _choose_batch_tiling(batch: int):
    """Pick (padded_batch, batch_tile).

    Small batch: one whole-batch tile (latency path, no wasted rows).
    Large batch: 128..512-row tiles with >= 2 grid steps so the "parallel" batch
    axis can shard across v7x's two TensorCores (v5e/v6e: bigger tiles only).
    """
    bp = _round_up(batch, 8)
    if bp <= 128:
        return bp, bp
    tb = min(512, max(128, (_round_up(bp, 128) // 2) // 128 * 128))
    return _round_up(bp, tb), tb


def _make_mlp_kernel(num_layers: int):
    """Fused kernel: num_layers x (matmul + bias [+ ELU]); Dropout(p=0) is identity."""

    def kernel(x_ref, w0_ref, wr_ref, b_ref, o_ref):
        h = x_ref[...]                               # (TB, Din) f32 activation
        for l in range(num_layers):                  # static unroll over layers
            w = w0_ref[...] if l == 0 else wr_ref[l - 1]   # resident VMEM weight block
            b = b_ref[pl.ds(l, 1), :]                # (1, D) f32 bias row
            # bf16 (if enabled) feeds the MXU; accumulation is always f32.
            y = jnp.dot(h.astype(w.dtype), w, preferred_element_type=jnp.float32) + b
            if l < num_layers - 1:
                # ELU(alpha=1) in f32 on the VPU/EUP.  Clamp the exp argument so the
                # (discarded) positive branch never overflows.
                y = jnp.where(y > 0, y, jnp.exp(jnp.minimum(y, 0.0)) - 1.0)
                # Dropout(p=0) -> identity (eval semantics).
                # TODO(synk): p>0 training-mode dropout would need pltpu.prng_* masking.
            h = y
        o_ref[...] = h.astype(o_ref.dtype)

    return kernel


def prepare_mlp_params(params, use_bf16: bool = False):
    """One-time host-side padding/stacking (kept off the per-call forward path).

    params: tuple of (w: (din, dout), b: (dout,)) pairs, first layer first.
    Returns (w_first, w_rest, b_stack):
      w_first : (din0, D)      first-layer weight, only output lanes padded to D
      w_rest  : (L-1, D, D)    remaining weights, zero-padded both dims
      b_stack : (L, D)         biases, zero-padded, kept f32 (added post-accumulate)
    """
    L = len(params)
    assert L >= 2, "module always has >= 1 hidden layer + final layer"
    din0 = params[0][0].shape[0]
    out_dims = [w.shape[1] for w, _ in params]
    D = _round_up(max(out_dims), 128)                 # common lane-dense padded width
    wdtype = jnp.bfloat16 if use_bf16 else jnp.float32

    w0, b0 = params[0]
    w_first = (jnp.zeros((din0, D), jnp.float32)
               .at[:, : w0.shape[1]].set(w0.astype(jnp.float32)).astype(wdtype))

    ws = []
    bs = [jnp.zeros((D,), jnp.float32).at[: b0.shape[-1]].set(b0.reshape(-1).astype(jnp.float32))]
    for w, b in params[1:]:
        din, dout = w.shape
        ws.append(jnp.zeros((D, D), jnp.float32).at[:din, :dout].set(w.astype(jnp.float32)))
        bs.append(jnp.zeros((D,), jnp.float32).at[:dout].set(b.reshape(-1).astype(jnp.float32)))
    w_rest = jnp.stack(ws).astype(wdtype)             # (L-1, D, D)  stays resident in VMEM
    b_stack = jnp.stack(bs)                           # (L, D)       f32

    return w_first, w_rest, b_stack


def mlp_forward_pallas(x, w_first, w_rest, b_stack, *, num_classes):
    """x: (B, Din) f32.  Prepared params from prepare_mlp_params()."""
    B, Din = x.shape
    L = w_rest.shape[0] + 1
    D = w_first.shape[1]

    Bp, TB = _choose_batch_tiling(B)
    xp = x.astype(jnp.float32)
    if Bp != B:
        xp = jnp.zeros((Bp, Din), jnp.float32).at[:B].set(xp)   # pad rows only (rare)

    grid = (Bp // TB,)

    itemsize_w = jnp.dtype(w_first.dtype).itemsize
    flops = 2 * Bp * (Din * D + (L - 1) * D * D)
    transcendentals = Bp * (L - 1) * D                 # exp per ELU element
    bytes_accessed = (4 * Bp * Din                     # input (unpadded lanes)
                      + itemsize_w * (w_first.size + w_rest.size)
                      + 4 * b_stack.size
                      + 4 * Bp * D)                    # lane-dense output

    out = pl.pallas_call(
        _make_mlp_kernel(L),
        out_shape=jax.ShapeDtypeStruct((Bp, D), jnp.float32),
        grid_spec=pltpu.PrefetchScalarGridSpec(
            num_scalar_prefetch=0,
            grid=grid,
            in_specs=[
                pl.BlockSpec((TB, Din), lambda i: (i, 0)),        # activation tile (K=Din, no lane pad)
                pl.BlockSpec((Din, D), lambda i: (0, 0)),         # first-layer weight (constant block)
                pl.BlockSpec((L - 1, D, D), lambda i: (0, 0, 0)), # remaining weights (constant block)
                pl.BlockSpec((L, D), lambda i: (0, 0)),           # biases (constant block)
            ],
            out_specs=pl.BlockSpec((TB, D), lambda i: (i, 0)),    # lane-dense output tile
        ),
        compiler_params=pltpu.CompilerParams(
            dimension_semantics=("parallel",),        # megacore-shardable batch axis
        ),
        cost_estimate=pl.CostEstimate(
            flops=flops,
            transcendentals=transcendentals,
            bytes_accessed=bytes_accessed,
        ),
    )(xp, w_first, w_rest, b_stack)

    return out[:B, :num_classes]


mlp_forward = jax.jit(mlp_forward_pallas, static_argnames=("num_classes",))


def init_mlp_params(key, input_size, num_classes, hidden_sizes):
    """PyTorch nn.Linear default init: U(-k, k), k = 1/sqrt(fan_in)."""
    params = []
    in_dims = [input_size] * len(hidden_sizes) + [hidden_sizes[-1]]
    out_dims = list(hidden_sizes) + [num_classes]
    for i, (din, dout) in enumerate(zip(in_dims, out_dims)):
        kw, kb = jax.random.split(jax.random.fold_in(key, i))
        bound = 1.0 / (din ** 0.5)
        # PyTorch stores weight as (out, in); transpose to (in, out) for y = x @ W + b.
        w = jax.random.uniform(kw, (dout, din), jnp.float32, -bound, bound).T
        b = jax.random.uniform(kb, (dout,), jnp.float32, -bound, bound)
        params.append((w, b))
    return params


def mlp_reference(x, params):
    """Pure-JAX reference with exact ELU (expm1), matching PyTorch semantics."""
    h = x
    n = len(params)
    for i, (w, b) in enumerate(params):
        h = h @ w + b
        if i < n - 1:
            h = jax.nn.elu(h)
    return h


if __name__ == "__main__":
    input_size = 32
    hidden_sizes = [32, 48]    # hidden_sizes[:-1] must equal input_size (see module note)
    num_classes = 10
    batch = 8

    key = jax.random.PRNGKey(0)
    kx, kp = jax.random.split(key)
    x = jax.random.normal(kx, (batch, input_size), jnp.float32)
    params = tuple(init_mlp_params(kp, input_size, num_classes, hidden_sizes))
    ref = mlp_reference(x, params)

    # --- f32 path (strict tolerance vs reference) --------------------------------
    w_first, w_rest, b_stack = prepare_mlp_params(params, use_bf16=False)
    out = jax.block_until_ready(
        mlp_forward(x, w_first, w_rest, b_stack, num_classes=num_classes))
    assert out.shape == (batch, num_classes), out.shape
    assert jnp.allclose(out, ref, atol=1e-5, rtol=1e-5), (
        "f32 mismatch vs reference: max abs diff = %e"
        % float(jnp.max(jnp.abs(out - ref))))

    # --- bf16-MXU path (operands bf16, f32 accumulation; looser tolerance) -------
    w_first16, w_rest16, b_stack16 = prepare_mlp_params(params, use_bf16=True)
    out16 = jax.block_until_ready(
        mlp_forward(x, w_first16, w_rest16, b_stack16, num_classes=num_classes))
    assert jnp.allclose(out16, ref, atol=1e-1, rtol=1e-1), (
        "bf16 mismatch vs reference: max abs diff = %e"
        % float(jnp.max(jnp.abs(out16 - ref))))

    # --- large-batch path: exercises 256-row tiles and the >=2-step parallel grid -
    xb = jax.random.normal(kx, (512, input_size), jnp.float32)
    outb = jax.block_until_ready(
        mlp_forward(xb, w_first, w_rest, b_stack, num_classes=num_classes))
    refb = mlp_reference(xb, params)
    assert outb.shape == (512, num_classes), outb.shape
    assert jnp.allclose(outb, refb, atol=1e-5, rtol=1e-5), (
        "large-batch mismatch vs reference: max abs diff = %e"
        % float(jnp.max(jnp.abs(outb - refb))))

    print("KERNEL_OK")
</pallas_src>

<mosaic_0001>
module attributes {stable_mosaic.version = 11 : i64} {
  func.func @kernel(%arg0: i32, %arg1: memref<8x32xf32, #tpu.memory_space<vmem>>, %arg2: memref<32x128xf32, #tpu.memory_space<vmem>>, %arg3: memref<2x128x128xf32, #tpu.memory_space<vmem>>, %arg4: memref<3x128xf32, #tpu.memory_space<vmem>>, %arg5: memref<8x128xf32, #tpu.memory_space<vmem>>) attributes {dimension_semantics = [#tpu.dimension_semantics<parallel>], iteration_bounds = array<i64: 1>, scalar_prefetch = 0 : i64, scratch_operands = 0 : i64, tpu.core_type = #tpu.core_type<tc>, window_params = [{transform_indices = @transform_0, window_bounds = array<i64: 8, 32>}, {pipeline_mode = #tpu.pipeline_mode<synchronous>, transform_indices = @transform_1, window_bounds = array<i64: 32, 128>}, {pipeline_mode = #tpu.pipeline_mode<synchronous>, transform_indices = @transform_2, window_bounds = array<i64: 2, 128, 128>}, {pipeline_mode = #tpu.pipeline_mode<synchronous>, transform_indices = @transform_3, window_bounds = array<i64: 3, 128>}, {transform_indices = @transform_4, window_bounds = array<i64: 8, 128>}]} {
    %c0 = arith.constant 0 : index
    %c0_0 = arith.constant 0 : index
    %0 = vector.load %arg1[%c0, %c0_0] : memref<8x32xf32, #tpu.memory_space<vmem>>, vector<8x32xf32>
    %c0_1 = arith.constant 0 : index
    %c0_2 = arith.constant 0 : index
    %1 = vector.load %arg2[%c0_1, %c0_2] : memref<32x128xf32, #tpu.memory_space<vmem>>, vector<32x128xf32>
    %c0_3 = arith.constant 0 : index
    %c0_4 = arith.constant 0 : index
    %2 = vector.load %arg4[%c0_3, %c0_4] : memref<3x128xf32, #tpu.memory_space<vmem>>, vector<1x128xf32>
    %cst = arith.constant dense<0.000000e+00> : vector<8x128xf32>
    %3 = tpu.matmul %0, %1, %cst {dimension_numbers = #tpu.dot_dimension_numbers<[1], [0], [0], [1], [0, 0, 1, 1], [], []>} : vector<8x32xf32>, vector<32x128xf32>, vector<8x128xf32> -> vector<8x128xf32>
    %4 = vector.broadcast %2 : vector<1x128xf32> to vector<8x128xf32>
    %5 = arith.addf %3, %4 : vector<8x128xf32>
    %cst_5 = arith.constant 0.000000e+00 : f32
    %6 = vector.broadcast %cst_5 : f32 to vector<8x128xf32>
    %7 = arith.cmpf ogt, %5, %6 : vector<8x128xf32>
    %cst_6 = arith.constant 0.000000e+00 : f32
    %8 = vector.broadcast %cst_6 : f32 to vector<8x128xf32>
    %9 = arith.minimumf %5, %8 : vector<8x128xf32>
    %10 = math.exp %9 : vector<8x128xf32>
    %cst_7 = arith.constant 1.000000e+00 : f32
    %11 = vector.broadcast %cst_7 : f32 to vector<8x128xf32>
    %12 = arith.subf %10, %11 : vector<8x128xf32>
    %13 = arith.select %7, %5, %12 : vector<8x128xi1>, vector<8x128xf32>
    %c0_8 = arith.constant 0 : index
    %c0_9 = arith.constant 0 : index
    %c0_10 = arith.constant 0 : index
    %14 = vector.load %arg3[%c0_8, %c0_9, %c0_10] : memref<2x128x128xf32, #tpu.memory_space<vmem>>, vector<1x128x128xf32>
    %15 = vector.shape_cast %14 : vector<1x128x128xf32> to vector<128x128xf32>
    %c1 = arith.constant 1 : index
    %c0_11 = arith.constant 0 : index
    %16 = vector.load %arg4[%c1, %c0_11] : memref<3x128xf32, #tpu.memory_space<vmem>>, vector<1x128xf32>
    %cst_12 = arith.constant dense<0.000000e+00> : vector<8x128xf32>
    %17 = tpu.matmul %13, %15, %cst_12 {dimension_numbers = #tpu.dot_dimension_numbers<[1], [0], [0], [1], [0, 0, 1, 1], [], []>} : vector<8x128xf32>, vector<128x128xf32>, vector<8x128xf32> -> vector<8x128xf32>
    %18 = vector.broadcast %16 : vector<1x128xf32> to vector<8x128xf32>
    %19 = arith.addf %17, %18 : vector<8x128xf32>
    %cst_13 = arith.constant 0.000000e+00 : f32
    %20 = vector.broadcast %cst_13 : f32 to vector<8x128xf32>
    %21 = arith.cmpf ogt, %19, %20 : vector<8x128xf32>
    %cst_14 = arith.constant 0.000000e+00 : f32
    %22 = vector.broadcast %cst_14 : f32 to vector<8x128xf32>
    %23 = arith.minimumf %19, %22 : vector<8x128xf32>
    %24 = math.exp %23 : vector<8x128xf32>
    %cst_15 = arith.constant 1.000000e+00 : f32
    %25 = vector.broadcast %cst_15 : f32 to vector<8x128xf32>
    %26 = arith.subf %24, %25 : vector<8x128xf32>
    %27 = arith.select %21, %19, %26 : vector<8x128xi1>, vector<8x128xf32>
    %c1_16 = arith.constant 1 : index
    %c0_17 = arith.constant 0 : index
    %c0_18 = arith.constant 0 : index
    %28 = vector.load %arg3[%c1_16, %c0_17, %c0_18] : memref<2x128x128xf32, #tpu.memory_space<vmem>>, vector<1x128x128xf32>
    %29 = vector.shape_cast %28 : vector<1x128x128xf32> to vector<128x128xf32>
    %c2 = arith.constant 2 : index
    %c0_19 = arith.constant 0 : index
    %30 = vector.load %arg4[%c2, %c0_19] : memref<3x128xf32, #tpu.memory_space<vmem>>, vector<1x128xf32>
    %cst_20 = arith.constant dense<0.000000e+00> : vector<8x128xf32>
    %31 = tpu.matmul %27, %29, %cst_20 {dimension_numbers = #tpu.dot_dimension_numbers<[1], [0], [0], [1], [0, 0, 1, 1], [], []>} : vector<8x128xf32>, vector<128x128xf32>, vector<8x128xf32> -> vector<8x128xf32>
    %32 = vector.broadcast %30 : vector<1x128xf32> to vector<8x128xf32>
    %33 = arith.addf %31, %32 : vector<8x128xf32>
    %c0_21 = arith.constant 0 : index
    %c0_22 = arith.constant 0 : index
    %34 = vector.load %arg5[%c0_21, %c0_22] : memref<8x128xf32, #tpu.memory_space<vmem>>, vector<8x128xf32>
    tpu.vector_store %arg5[%c0_21, %c0_22], %33 {strides = array<i32>} : memref<8x128xf32, #tpu.memory_space<vmem>>, vector<8x128xf32>,
    return
  }
  func.func @transform_0(%arg0: i32) -> (i32, i32) {
    %c0_i32 = arith.constant 0 : i32
    %c0_i32_0 = arith.constant 0 : i32
    return %arg0, %c0_i32 : i32, i32
  }
  func.func @transform_1(%arg0: i32) -> (i32, i32) {
    %c0_i32 = arith.constant 0 : i32
    %c0_i32_0 = arith.constant 0 : i32
    %c0_i32_1 = arith.constant 0 : i32
    return %c0_i32, %c0_i32_0 : i32, i32
  }
  func.func @transform_2(%arg0: i32) -> (i32, i32, i32) {
    %c0_i32 = arith.constant 0 : i32
    %c0_i32_0 = arith.constant 0 : i32
    %c0_i32_1 = arith.constant 0 : i32
    %c0_i32_2 = arith.constant 0 : i32
    return %c0_i32, %c0_i32_0, %c0_i32_1 : i32, i32, i32
  }
  func.func @transform_3(%arg0: i32) -> (i32, i32) {
    %c0_i32 = arith.constant 0 : i32
    %c0_i32_0 = arith.constant 0 : i32
    %c0_i32_1 = arith.constant 0 : i32
    return %c0_i32, %c0_i32_0 : i32, i32
  }
  func.func @transform_4(%arg0: i32) -> (i32, i32) {
    %c0_i32 = arith.constant 0 : i32
    %c0_i32_0 = arith.constant 0 : i32
    return %arg0, %c0_i32 : i32, i32
  }
}

</mosaic_0001>

<llo_original>
// kernel: mlp_forward_pallas.1
$region0: #{mlp_forward_pallas.1}
  #allocation0 [shape = 'u32[]', space=smem, size = 0x4, offset = 0x4, fixed_abs, tag = 'smem constant byte address 0x4 - core index']
  #allocation1 [shape = 'u32[144,128]{1,0:T(1,128)}', space=vmem, size = 0x12000, scoped, tag = 'internal scratch']
  %s0 = inlined_call_operand.hbm [shape: f32[8,32], index: 0, kind: input, shape index: {}]
  %s1 = inlined_call_operand.hbm [shape: f32[32,128], index: 1, kind: input, shape index: {}]
  %s2 = inlined_call_operand.hbm [shape: f32[2,128,128], index: 2, kind: input, shape index: {}]
  %s3 = inlined_call_operand.vmem [shape: f32[3,128], index: 3, kind: input, shape index: {}]
  %s4 = inlined_call_operand.hbm [shape: f32[8,128], index: 4, kind: output, shape index: {}]
  %s5 = sld [smem:[#allocation0]]
  $region38: #{mlp_forward_pallas.1} parent=0
    _
  %s7 = ssub.s32 1, %s5
  %s8 = scalar_select 0, %s7, %s5
  $region1: #{mlp_forward_pallas.1} parent=0
    #allocation2 [shape = 'u8[4096]{0}', space=vmem, size = 0x1000, scoped, tag = 'input window, operand 0, single buffered']
    #allocation3 [shape = 's32[1]{0}', space=sflag, size = 0x4, scoped, tag = 'scoped memory for mlp_forward_pallas.1']
    #allocation4 [shape = 's32[1]{0}', space=sflag, size = 0x4, scoped, tag = 'scoped memory for mlp_forward_pallas.1']
    #allocation5 [shape = 'u8[16384]{0}', space=vmem, size = 0x4000, scoped, tag = 'input window, operand 1, single buffered']
    #allocation6 [shape = 's32[1]{0}', space=sflag, size = 0x4, scoped, tag = 'scoped memory for mlp_forward_pallas.1']
    #allocation7 [shape = 'u8[131072]{0}', space=vmem, size = 0x20000, scoped, tag = 'input window, operand 2, single buffered']
    #allocation8 [shape = 'u8[4096]{0}', space=vmem, size = 0x1000, scoped, tag = 'output window, operand 0, single buffered']
    %9 = vsyncpa [#allocation3], 0
    %10 = vsyncpa [#allocation6], 0
    %11 = vsyncpa [#allocation4], 0
    // Predicated region
    $region2: #{mlp_forward_pallas.1} parent=1 // pred_check
      _
    $region3: #{mlp_forward_pallas.1} parent=1 // pred_check_branch
      %13 = sbr.rel (0) target = $region5
    $region4: #{mlp_forward_pallas.1} parent=1 // pred_region
      %s15 = ssub.s32 128, 128
      %16 = vsyncadd [#allocation3], %s15
      %s18 = sshll.u32 [#allocation2], 4
      %s19 = int_to_ptr.vmem [resolvable:$true] %s18
      %21 = dma.hbm_to_vmem [thread:$0]  %s0, 128, %s19, [#allocation3]
    $region5: #{mlp_forward_pallas.1} parent=1 // pred_fallthru
      _
    // Predicated region
    $region6: #{mlp_forward_pallas.1} parent=1 // pred_check
      _
    $region7: #{mlp_forward_pallas.1} parent=1 // pred_check_branch
      %23 = sbr.rel (0) target = $region9
    $region8: #{mlp_forward_pallas.1} parent=1 // pred_region
      %s25 = ssub.s32 512, 512
      %26 = vsyncadd [#allocation6], %s25
      %s27 = sshll.u32 [#allocation5], 4
      %s28 = int_to_ptr.vmem [resolvable:$true] %s27
      %33 = dma.hbm_to_vmem [thread:$0]  %s1, 512, %s28, [#allocation6], 128, 128, 8
    $region9: #{mlp_forward_pallas.1} parent=1 // pred_fallthru
      _
    // Predicated region
    $region10: #{mlp_forward_pallas.1} parent=1 // pred_check
      _
    $region11: #{mlp_forward_pallas.1} parent=1 // pred_check_branch
      %35 = sbr.rel (0) target = $region13
    $region12: #{mlp_forward_pallas.1} parent=1 // pred_region
      %s37 = ssub.s32 4096, 4096
      %38 = vsyncadd [#allocation6], %s37
      %s39 = sshll.u32 [#allocation7], 4
      %s40 = int_to_ptr.vmem [resolvable:$true] %s39
      %45 = dma.hbm_to_vmem [thread:$0]  %s2, 4096, %s40, [#allocation6], 128, 128, 8
    $region13: #{mlp_forward_pallas.1} parent=1 // pred_fallthru
      _
    // Predicated region
    $region14: #{mlp_forward_pallas.1} parent=1 // pred_check
      _
    $region15: #{mlp_forward_pallas.1} parent=1 // pred_check_branch
      %47 = sbr.rel (0) target = $region17
    $region16: #{mlp_forward_pallas.1} parent=1 // pred_region
      _
    $region17: #{mlp_forward_pallas.1} parent=1 // pred_fallthru
      _
    // Predicated region
    $region18: #{mlp_forward_pallas.1} parent=1 // pred_check
      _
    $region19: #{mlp_forward_pallas.1} parent=1 // pred_check_branch
      %49 = sbr.rel (0) target = $region21
    $region20: #{mlp_forward_pallas.1} parent=1 // pred_region
      %50 = dma.done [#allocation3], 128
    $region21: #{mlp_forward_pallas.1} parent=1 // pred_fallthru
      _
    // Predicated region
    $region22: #{mlp_forward_pallas.1} parent=1 // pred_check
      _
    $region23: #{mlp_forward_pallas.1} parent=1 // pred_check_branch
      %52 = sbr.rel (0) target = $region25
    $region24: #{mlp_forward_pallas.1} parent=1 // pred_region
      %53 = dma.done [#allocation6], 512
    $region25: #{mlp_forward_pallas.1} parent=1 // pred_fallthru
      _
    // Predicated region
    $region26: #{mlp_forward_pallas.1} parent=1 // pred_check
      _
    $region27: #{mlp_forward_pallas.1} parent=1 // pred_check_branch
      %55 = sbr.rel (0) target = $region29
    $region28: #{mlp_forward_pallas.1} parent=1 // pred_region
      %56 = dma.done [#allocation6], 4096
    $region29: #{mlp_forward_pallas.1} parent=1 // pred_fallthru
      _
    %v57 = vld [vmem:[#allocation2] sm:$0xff]
    %v58 = vld [vmem:[#allocation5] sm:$0xff]
    %v59 = vld [vmem:[#allocation5 + $0x8] sm:$0xff]
    %v60 = vld [vmem:[#allocation5 + $0x10] sm:$0xff]
    %v61 = vld [vmem:[#allocation5 + $0x18] sm:$0xff]
    %v62 = vld [vmem:[%s3] sm:$0x1]
    %v63 = vlaneseq
    %v64 = vshrl.u32 %v63, 7
    %v65 = vsub.s32 0, %v64
    %v66 = vrot.slane %v62, %v65
    %vm67 = vcmask 261120
    %v69 = vsel %vm67, %v57, 0
    %71 = vmatprep.subr.mxu0 0.0
    %72 = vmatpush1.msra.mxu0 %v58
    %73 = vmatprep.subr.mxu0 0.0
    %74 = vmatpush1.msra.mxu0 %v59
    %75 = vmatprep.subr.mxu0 0.0
    %76 = vmatpush1.msra.mxu0 %v60
    %77 = vmatprep.subr.mxu0 0.0
    %78 = vmatpush1.msra.mxu0 %v61
    %79 = vmatprep.subr.mxu0 0.0
    %80 = vmatpush1.msra.mxu0 0.0
    %81 = vmatprep.subr.mxu0 0.0
    %82 = vmatpush1.msra.mxu0 0.0
    %83 = vmatprep.subr.mxu0 0.0
    %84 = vmatpush1.msra.mxu0 0.0
    %85 = vmatprep.subr.mxu0 0.0
    %86 = vmatpush1.msra.mxu0 0.0
    %87 = vmatprep.subr.mxu0 0.0
    %88 = vmatpush1.msra.mxu0 0.0
    %89 = vmatprep.subr.mxu0 0.0
    %90 = vmatpush1.msra.mxu0 0.0
    %91 = vmatprep.subr.mxu0 0.0
    %92 = vmatpush1.msra.mxu0 0.0
    %93 = vmatprep.subr.mxu0 0.0
    %94 = vmatpush1.msra.mxu0 0.0
    %95 = vmatprep.subr.mxu0 0.0
    %96 = vmatpush1.msra.mxu0 0.0
    %97 = vmatprep.subr.mxu0 0.0
    %98 = vmatpush1.msra.mxu0 0.0
    %99 = vmatprep.subr.mxu0 0.0
    %100 = vmatpush1.msra.mxu0 0.0
    %101 = vmatprep.subr.mxu0 0.0
    %102 = vmatpush1.msra.mxu0 0.0
    %103 = vmatprep.subr.mxu0 0.0
    %104 = vmatpush1.msra.mxu0 0.0
    %105 = vmatprep.subr.mxu0 0.0
    %106 = vmatpush1.msra.mxu0 0.0
    %107 = vmatprep.subr.mxu0 0.0
    %108 = vmatpush1.msra.mxu0 0.0
    %109 = vmatprep.subr.mxu0 0.0
    %110 = vmatpush1.msra.mxu0 0.0
    %111 = vmatprep.subr.mxu0 0.0
    %112 = vmatpush1.msra.mxu0 0.0
    %113 = vmatprep.subr.mxu0 0.0
    %114 = vmatpush1.msra.mxu0 0.0
    %115 = vmatprep.subr.mxu0 0.0
    %116 = vmatpush1.msra.mxu0 0.0
    %117 = vmatprep.subr.mxu0 0.0
    %118 = vmatpush1.msra.mxu0 0.0
    %119 = vmatprep.subr.mxu0 0.0
    %120 = vmatpush1.msra.mxu0 0.0
    %121 = vmatprep.subr.mxu0 0.0
    %122 = vmatpush1.msra.mxu0 0.0
    %123 = vmatprep.subr.mxu0 0.0
    %124 = vmatpush1.msra.mxu0 0.0
    %125 = vmatprep.subr.mxu0 0.0
    %126 = vmatpush1.msra.mxu0 0.0
    %127 = vmatprep.subr.mxu0 0.0
    %128 = vmatpush1.msra.mxu0 0.0
    %129 = vmatprep.subr.mxu0 0.0
    %130 = vmatpush1.msra.mxu0 0.0
    %131 = vmatprep.subr.mxu0 0.0
    %132 = vmatpush1.msra.mxu0 0.0
    %133 = vmatprep.subr.mxu0 0.0
    %134 = vmatpush1.msra.mxu0 0.0
    %135 = vmatprep.mubr.f32.mxu0 0.0
    %136 = vmatmul.mubr.f32.gmra.mrb[0].mxu0 %v69
    %v137 = vpop.f32.mrb[0].mxu0
    %v138 = vadd.f32 %v66, %v137
    %v139 = vpop.f32.mrb[0].mxu0
    %140 = vdwg.mxu0
    %vm141 = vcmp.gt.f32.partialorder %v138, 0.0
    %v142 = vmin.f32 %v138, 0.0
    %v143 = vmul.f32 %v142, 1.442695
    %v144 = vpow.pop %v143
    %v145 = vsub.f32 %v144, 1.0
    %v146 = vsel %vm141, %v138, %v145
    %v147 = vld [vmem:[#allocation7] sm:$0xff]
    %v148 = vld [vmem:[#allocation7 + $0x8] sm:$0xff]
    %v149 = vld [vmem:[#allocation7 + $0x10] sm:$0xff]
    %v150 = vld [vmem:[#allocation7 + $0x18] sm:$0xff]
    %v151 = vld [vmem:[#allocation7 + $0x20] sm:$0xff]
    %v152 = vld [vmem:[#allocation7 + $0x28] sm:$0xff]
    %v153 = vld [vmem:[#allocation7 + $0x30] sm:$0xff]
    %v154 = vld [vmem:[#allocation7 + $0x38] sm:$0xff]
    %v155 = vld [vmem:[#allocation7 + $0x40] sm:$0xff]
    %v156 = vld [vmem:[#allocation7 + $0x48] sm:$0xff]
    %v157 = vld [vmem:[#allocation7 + $0x50] sm:$0xff]
    %v158 = vld [vmem:[#allocation7 + $0x58] sm:$0xff]
    %v159 = vld [vmem:[#allocation7 + $0x60] sm:$0xff]
    %v160 = vld [vmem:[#allocation7 + $0x68] sm:$0xff]
    %v161 = vld [vmem:[#allocation7 + $0x70] sm:$0xff]
    %v162 = vld [vmem:[#allocation7 + $0x78] sm:$0xff]
    %v163 = vld [vmem:[%s3 + $0x1] sm:$0x1]
    %v164 = vlaneseq
    %v165 = vshrl.u32 %v164, 7
    %v166 = vsub.s32 0, %v165
    %v167 = vrot.slane %v163, %v166
    %168 = vmatprep.subr.mxu0 0.0
    %169 = vmatpush1.msra.mxu0 %v147
    %170 = vmatprep.subr.mxu0 0.0
    %171 = vmatpush1.msra.mxu0 %v148
    %172 = vmatprep.subr.mxu0 0.0
    %173 = vmatpush1.msra.mxu0 %v149
    %174 = vmatprep.subr.mxu0 0.0
    %175 = vmatpush1.msra.mxu0 %v150
    %176 = vmatprep.subr.mxu0 0.0
    %177 = vmatpush1.msra.mxu0 %v151
    %178 = vmatprep.subr.mxu0 0.0
    %179 = vmatpush1.msra.mxu0 %v152
    %180 = vmatprep.subr.mxu0 0.0
    %181 = vmatpush1.msra.mxu0 %v153
    %182 = vmatprep.subr.mxu0 0.0
    %183 = vmatpush1.msra.mxu0 %v154
    %184 = vmatprep.subr.mxu0 0.0
    %185 = vmatpush1.msra.mxu0 %v155
    %186 = vmatprep.subr.mxu0 0.0
    %187 = vmatpush1.msra.mxu0 %v156
    %188 = vmatprep.subr.mxu0 0.0
    %189 = vmatpush1.msra.mxu0 %v157
    %190 = vmatprep.subr.mxu0 0.0
    %191 = vmatpush1.msra.mxu0 %v158
    %192 = vmatprep.subr.mxu0 0.0
    %193 = vmatpush1.msra.mxu0 %v159
    %194 = vmatprep.subr.mxu0 0.0
    %195 = vmatpush1.msra.mxu0 %v160
    %196 = vmatprep.subr.mxu0 0.0
    %197 = vmatpush1.msra.mxu0 %v161
    %198 = vmatprep.subr.mxu0 0.0
    %199 = vmatpush1.msra.mxu0 %v162
    %200 = vmatprep.subr.mxu0 0.0
    %201 = vmatpush1.msra.mxu0 0.0
    %202 = vmatprep.subr.mxu0 0.0
    %203 = vmatpush1.msra.mxu0 0.0
    %204 = vmatprep.subr.mxu0 0.0
    %205 = vmatpush1.msra.mxu0 0.0
    %206 = vmatprep.subr.mxu0 0.0
    %207 = vmatpush1.msra.mxu0 0.0
    %208 = vmatprep.subr.mxu0 0.0
    %209 = vmatpush1.msra.mxu0 0.0
    %210 = vmatprep.subr.mxu0 0.0
    %211 = vmatpush1.msra.mxu0 0.0
    %212 = vmatprep.subr.mxu0 0.0
    %213 = vmatpush1.msra.mxu0 0.0
    %214 = vmatprep.subr.mxu0 0.0
    %215 = vmatpush1.msra.mxu0 0.0
    %216 = vmatprep.subr.mxu0 0.0
    %217 = vmatpush1.msra.mxu0 0.0
    %218 = vmatprep.subr.mxu0 0.0
    %219 = vmatpush1.msra.mxu0 0.0
    %220 = vmatprep.subr.mxu0 0.0
    %221 = vmatpush1.msra.mxu0 0.0
    %222 = vmatprep.subr.mxu0 0.0
    %223 = vmatpush1.msra.mxu0 0.0
    %224 = vmatprep.subr.mxu0 0.0
    %225 = vmatpush1.msra.mxu0 0.0
    %226 = vmatprep.subr.mxu0 0.0
    %227 = vmatpush1.msra.mxu0 0.0
    %228 = vmatprep.subr.mxu0 0.0
    %229 = vmatpush1.msra.mxu0 0.0
    %230 = vmatprep.subr.mxu0 0.0
    %231 = vmatpush1.msra.mxu0 0.0
    %232 = vmatprep.mubr.f32.mxu0 0.0
    %233 = vmatmul.mubr.f32.gmra.mrb[0].mxu0 %v146
    %v234 = vpop.f32.mrb[0].mxu0
    %v235 = vadd.f32 %v167, %v234
    %v236 = vpop.f32.mrb[0].mxu0
    %237 = vdwg.mxu0
    %vm238 = vcmp.gt.f32.partialorder %v235, 0.0
    %v239 = vmin.f32 %v235, 0.0
    %v240 = vmul.f32 %v239, 1.442695
    %v241 = vpow.pop %v240
    %v242 = vsub.f32 %v241, 1.0
    %v243 = vsel %vm238, %v235, %v242
    %s244 = scalar_lea.vmem [#allocation7], 128
    %v245 = vld [vmem:[%s244] sm:$0xff]
    %v246 = vld [vmem:[%s244 + $0x8] sm:$0xff]
    %v247 = vld [vmem:[%s244 + $0x10] sm:$0xff]
    %v248 = vld [vmem:[%s244 + $0x18] sm:$0xff]
    %v249 = vld [vmem:[%s244 + $0x20] sm:$0xff]
    %v250 = vld [vmem:[%s244 + $0x28] sm:$0xff]
    %v251 = vld [vmem:[%s244 + $0x30] sm:$0xff]
    %v252 = vld [vmem:[%s244 + $0x38] sm:$0xff]
    %v253 = vld [vmem:[%s244 + $0x40] sm:$0xff]
    %v254 = vld [vmem:[%s244 + $0x48] sm:$0xff]
    %v255 = vld [vmem:[%s244 + $0x50] sm:$0xff]
    %v256 = vld [vmem:[%s244 + $0x58] sm:$0xff]
    %v257 = vld [vmem:[%s244 + $0x60] sm:$0xff]
    %v258 = vld [vmem:[%s244 + $0x68] sm:$0xff]
    %v259 = vld [vmem:[%s244 + $0x70] sm:$0xff]
    %v260 = vld [vmem:[%s244 + $0x78] sm:$0xff]
    %v261 = vld [vmem:[%s3 + $0x2] sm:$0x1]
    %v262 = vlaneseq
    %v263 = vshrl.u32 %v262, 7
    %v264 = vsub.s32 0, %v263
    %v265 = vrot.slane %v261, %v264
    %266 = vmatprep.subr.mxu0 0.0
    %267 = vmatpush1.msra.mxu0 %v245
    %268 = vmatprep.subr.mxu0 0.0
    %269 = vmatpush1.msra.mxu0 %v246
    %270 = vmatprep.subr.mxu0 0.0
    %271 = vmatpush1.msra.mxu0 %v247
    %272 = vmatprep.subr.mxu0 0.0
    %273 = vmatpush1.msra.mxu0 %v248
    %274 = vmatprep.subr.mxu0 0.0
    %275 = vmatpush1.msra.mxu0 %v249
    %276 = vmatprep.subr.mxu0 0.0
    %277 = vmatpush1.msra.mxu0 %v250
    %278 = vmatprep.subr.mxu0 0.0
    %279 = vmatpush1.msra.mxu0 %v251
    %280 = vmatprep.subr.mxu0 0.0
    %281 = vmatpush1.msra.mxu0 %v252
    %282 = vmatprep.subr.mxu0 0.0
    %283 = vmatpush1.msra.mxu0 %v253
    %284 = vmatprep.subr.mxu0 0.0
    %285 = vmatpush1.msra.mxu0 %v254
    %286 = vmatprep.subr.mxu0 0.0
    %287 = vmatpush1.msra.mxu0 %v255
    %288 = vmatprep.subr.mxu0 0.0
    %289 = vmatpush1.msra.mxu0 %v256
    %290 = vmatprep.subr.mxu0 0.0
    %291 = vmatpush1.msra.mxu0 %v257
    %292 = vmatprep.subr.mxu0 0.0
    %293 = vmatpush1.msra.mxu0 %v258
    %294 = vmatprep.subr.mxu0 0.0
    %295 = vmatpush1.msra.mxu0 %v259
    %296 = vmatprep.subr.mxu0 0.0
    %297 = vmatpush1.msra.mxu0 %v260
    %298 = vmatprep.subr.mxu0 0.0
    %299 = vmatpush1.msra.mxu0 0.0
    %300 = vmatprep.subr.mxu0 0.0
    %301 = vmatpush1.msra.mxu0 0.0
    %302 = vmatprep.subr.mxu0 0.0
    %303 = vmatpush1.msra.mxu0 0.0
    %304 = vmatprep.subr.mxu0 0.0
    %305 = vmatpush1.msra.mxu0 0.0
    %306 = vmatprep.subr.mxu0 0.0
    %307 = vmatpush1.msra.mxu0 0.0
    %308 = vmatprep.subr.mxu0 0.0
    %309 = vmatpush1.msra.mxu0 0.0
    %310 = vmatprep.subr.mxu0 0.0
    %311 = vmatpush1.msra.mxu0 0.0
    %312 = vmatprep.subr.mxu0 0.0
    %313 = vmatpush1.msra.mxu0 0.0
    %314 = vmatprep.subr.mxu0 0.0
    %315 = vmatpush1.msra.mxu0 0.0
    %316 = vmatprep.subr.mxu0 0.0
    %317 = vmatpush1.msra.mxu0 0.0
    %318 = vmatprep.subr.mxu0 0.0
    %319 = vmatpush1.msra.mxu0 0.0
    %320 = vmatprep.subr.mxu0 0.0
    %321 = vmatpush1.msra.mxu0 0.0
    %322 = vmatprep.subr.mxu0 0.0
    %323 = vmatpush1.msra.mxu0 0.0
    %324 = vmatprep.subr.mxu0 0.0
    %325 = vmatpush1.msra.mxu0 0.0
    %326 = vmatprep.subr.mxu0 0.0
    %327 = vmatpush1.msra.mxu0 0.0
    %328 = vmatprep.subr.mxu0 0.0
    %329 = vmatpush1.msra.mxu0 0.0
    %330 = vmatprep.mubr.f32.mxu0 0.0
    %331 = vmatmul.mubr.f32.gmra.mrb[0].mxu0 %v243
    %v332 = vpop.f32.mrb[0].mxu0
    %v333 = vadd.f32 %v265, %v332
    %v334 = vpop.f32.mrb[0].mxu0
    %335 = vdwg.mxu0
    %336 = vst [vmem:[#allocation8] sm:$0xff] %v333
    // Predicated region
    $region30: #{mlp_forward_pallas.1} parent=1 // pred_check
      _
    $region31: #{mlp_forward_pallas.1} parent=1 // pred_check_branch
      %338 = sbr.rel (0) target = $region33
    $region32: #{mlp_forward_pallas.1} parent=1 // pred_region
      %s340 = ssub.s32 128, 128
      %341 = vsyncadd [#allocation4], %s340
      %s343 = sshll.u32 [#allocation8], 4
      %s344 = int_to_ptr.vmem [resolvable:$true] %s343
      %346 = dma.vmem_to_hbm [thread:$0]  %s344, 128, %s4, [#allocation4]
    $region33: #{mlp_forward_pallas.1} parent=1 // pred_fallthru
      _
    // Predicated region
    $region34: #{mlp_forward_pallas.1} parent=1 // pred_check
      _
    $region35: #{mlp_forward_pallas.1} parent=1 // pred_check_branch
      %348 = sbr.rel (0) target = $region37
    $region36: #{mlp_forward_pallas.1} parent=1 // pred_region
      %349 = dma.done [#allocation4], 128
    $region37: #{mlp_forward_pallas.1} parent=1 // pred_fallthru
      _
    %350 = vsyncpa [#allocation3], 1
    %351 = vsyncpa [#allocation6], 1
    %352 = vsyncpa [#allocation4], 1

</llo_original>
